<compile_context>
chip_gen: v6e
topology: v6e:2x2x1
jax: 0.10.0
libtpu: 0.0.40
codegen_flags: <defaults>
</compile_context>

<pallas_src>
import functools

import jax
import jax.numpy as jnp
from jax import lax
from jax.experimental import pallas as pl
from jax.experimental.pallas import tpu as pltpu


def _make_mlp2_kernel(d_in, hidden, d_out, tile_r, chunk_r):
    """Kernel factory; all dims are tiny compile-time constants."""
    assert tile_r % chunk_r == 0
    n_chunks = tile_r // chunk_r

    def kernel(x_ref, w0_ref, b0_ref, w1_ref, b1_ref, o_ref):
        # x_ref: (d_in,  tile_r, 128) VMEM — batch on (sublane, lane), dense vregs
        # o_ref: (d_out, tile_r, 128) VMEM
        # w0/b0/w1/b1: SMEM-resident scalars (w0 already includes the /24 fold)

        # Hoist every SMEM scalar read out of the row-chunk loop.
        w0 = [[w0_ref[k, j] for j in range(hidden)] for k in range(d_in)]
        b0 = [b0_ref[j] for j in range(hidden)]
        w1 = [[w1_ref[j, m] for m in range(d_out)] for j in range(hidden)]
        b1 = [b1_ref[m] for m in range(d_out)]

        def sigmoid(net):
            # Single EUP push per element (vs exp followed by reciprocal).
            return 0.5 * jnp.tanh(0.5 * net) + 0.5

        def do_chunk(r0):
            x = x_ref[:, pl.ds(r0, chunk_r), :]          # (d_in, chunk_r, 128)

            # Layer 0: unrolled VPU broadcast-FMAs over the K = d_in contraction.
            h = []
            for j in range(hidden):
                net = b0[j] + w0[0][j] * x[0]
                for k in range(1, d_in):
                    net = net + w0[k][j] * x[k]
                h.append(sigmoid(net))                   # (chunk_r, 128)

            # Layer 1: unrolled over the hidden contraction; one combined store.
            outs = []
            for m in range(d_out):
                net = b1[m] + w1[0][m] * h[0]
                for j in range(1, hidden):
                    net = net + w1[j][m] * h[j]
                outs.append(sigmoid(net))
            o_ref[:, pl.ds(r0, chunk_r), :] = jnp.stack(outs, axis=0)

        if n_chunks == 1:
            do_chunk(0)
        else:
            # Bound the live vreg set for large blocks: one 8-32 sublane-row
            # chunk at a time, unrolled for LLO scheduler visibility.
            def body(c, carry):
                do_chunk(pl.multiple_of(c * chunk_r, chunk_r))
                return carry
            lax.fori_loop(0, n_chunks, body, 0, unroll=True)

    return kernel


@functools.partial(jax.jit, static_argnames=("tile_r",))
def neural_net_forward(x_raw, w0, b0, w1, b1, *, tile_r=8):
    """Pallas forward pass of NeuralNet on the RAW (unscaled) X.

    x_raw: (N, D_in) f32   (the /24 input scaling is folded into w0)
    w0: (D_in, H), b0: (H,), w1: (H, D_out), b1: (D_out,)
    Returns (N, D_out) f32 with the same semantics as the PyTorch module.

    tile_r: batch rows (of 128 samples each) per grid step; multiple of 8.
    tile_r = 8..32 keeps the live set well inside the 64-vreg file; larger
    tile_r is handled by the in-kernel chunk loop.
    """
    assert tile_r % 8 == 0, "tile_r must be a multiple of 8 (sublane count)"
    n, d_in = x_raw.shape
    hidden = w0.shape[1]
    d_out = w1.shape[1]

    # Fold __scaled(): (X/24) @ W0 == X @ (W0/24).  Tiny (D_in, H) op.
    w0_eff = (w0 / 24.0).astype(jnp.float32)
    b0 = b0.astype(jnp.float32)
    w1 = w1.astype(jnp.float32)
    b1 = b1.astype(jnp.float32)

    # Pad N up to a whole number of (tile_r, 128) blocks (VMEM refs have no
    # bounds checks); the padded tail is computed but sliced off below.
    block_n = tile_r * 128
    n_pad = (-n) % block_n
    x_p = x_raw.astype(jnp.float32)
    if n_pad:
        x_p = jnp.pad(x_p, ((0, n_pad), (0, 0)))
    n_padded = n + n_pad
    rows = n_padded // 128

    # Lane/sublane-dense layout plumbing: (N, d_in) -> (d_in, rows, 128) so the
    # batch fills both the 8-sublane and 128-lane axes of every vreg.
    # TODO(synk): at very large N this transpose is an extra HBM pass over X;
    # produce/consume the (feat, batch) layout upstream/downstream to avoid it.
    x3 = x_p.T.reshape(d_in, rows, 128)

    grid = (rows // tile_r,)

    # VMEM sizing from the actual double-buffered in+out blocks (+ headroom),
    # not a 128-MiB-era heuristic — safe on v7x's 64 MiB VMEM.
    block_bytes = (d_in + d_out) * tile_r * 128 * 4
    vmem_limit = min(32 * 1024 * 1024, max(16 * 1024 * 1024, 8 * block_bytes))

    smem_spec = pl.BlockSpec(memory_space=pltpu.MemorySpace.SMEM)
    chunk_r = min(tile_r, 32)

    out3 = pl.pallas_call(
        _make_mlp2_kernel(d_in, hidden, d_out, tile_r, chunk_r),
        out_shape=jax.ShapeDtypeStruct((d_out, rows, 128), jnp.float32),
        grid=grid,
        in_specs=[
            pl.BlockSpec((d_in, tile_r, 128), lambda i: (0, i, 0)),  # X block
            smem_spec,  # w0 (already /24-folded)
            smem_spec,  # b0
            smem_spec,  # w1
            smem_spec,  # b1
        ],
        out_specs=pl.BlockSpec((d_out, tile_r, 128), lambda i: (0, i, 0)),
        compiler_params=pltpu.CompilerParams(
            # Batch axis is embarrassingly parallel -> shard across the 2 TCs
            # on v7x; on v5e/v6e it is just the pipelined grid loop.
            dimension_semantics=("parallel",),
            vmem_limit_bytes=vmem_limit,
        ),
    )(x3, w0_eff, b0, w1, b1)

    # Drop the padded tail, back to the PyTorch-convention (N, D_out).
    return out3.reshape(d_out, n_padded)[:, :n].T


def _reference_forward(x_scaled, w0, b0, w1, b1):
    h0 = 1.0 / (1.0 + jnp.exp(-(x_scaled @ w0 + b0)))
    h1 = 1.0 / (1.0 + jnp.exp(-(h0 @ w1 + b1)))
    return h1


if __name__ == "__main__":
    # Shapes implied by the module: train_cnt samples, X_size features,
    # hidden layer of 3 neurons (h_layers = [3]), Y_size outputs.
    N, X_SIZE, HIDDEN, Y_SIZE = 2048, 4, 3, 2
    TILE_R = 8   # 8 x 128 = 1024 samples per step -> grid = (2,)
                 # (>= 2 parallel steps so v7x can use both TensorCores)

    key = jax.random.PRNGKey(0)
    k_x, k_w0, k_b0, k_w1, k_b1 = jax.random.split(key, 5)

    # Raw inputs (pre-scaling), like the X handed to NeuralNet.__init__.
    x_raw = jax.random.uniform(k_x, (N, X_SIZE), jnp.float32, 0.0, 24.0)

    # torch.randn-equivalent deterministic init for weights / biases.
    w0 = jax.random.normal(k_w0, (X_SIZE, HIDDEN), jnp.float32)
    b0 = jax.random.normal(k_b0, (HIDDEN,), jnp.float32)
    w1 = jax.random.normal(k_w1, (HIDDEN, Y_SIZE), jnp.float32)
    b1 = jax.random.normal(k_b1, (Y_SIZE,), jnp.float32)

    out = neural_net_forward(x_raw, w0, b0, w1, b1, tile_r=TILE_R)
    out = jax.block_until_ready(out)

    ref = _reference_forward(x_raw / 24.0, w0, b0, w1, b1)
    assert out.shape == (N, Y_SIZE)
    max_err = float(jnp.max(jnp.abs(out - ref)))
    # Exact (tanh-form) sigmoid -> tight tolerance; only f32 rounding from the
    # /24 fold into W0 and a different accumulation order remains.
    assert jnp.allclose(out, ref, atol=1e-5, rtol=1e-5), max_err

    # TODO(synk): backward()/do_train() (training loop) intentionally not
    # ported; only the forward pass is implemented per the kernel spec.
    print("KERNEL_OK")
</pallas_src>

<mosaic_0001>
module attributes {stable_mosaic.version = 11 : i64} {
  func.func @kernel(%arg0: i32, %arg1: memref<4x8x128xf32, #tpu.memory_space<vmem>>, %arg2: memref<4x3xf32, #tpu.memory_space<smem>>, %arg3: memref<3xf32, #tpu.memory_space<smem>>, %arg4: memref<3x2xf32, #tpu.memory_space<smem>>, %arg5: memref<2xf32, #tpu.memory_space<smem>>, %arg6: memref<2x8x128xf32, #tpu.memory_space<vmem>>) attributes {dimension_semantics = [#tpu.dimension_semantics<parallel>], iteration_bounds = array<i64: 2>, scalar_prefetch = 0 : i64, scratch_operands = 0 : i64, tpu.core_type = #tpu.core_type<tc>, window_params = [{transform_indices = @transform_0, window_bounds = array<i64: 4, 8, 128>}, {transform_indices = @transform_1, window_bounds = array<i64: 4, 3>}, {transform_indices = @transform_2, window_bounds = array<i64: 3>}, {transform_indices = @transform_3, window_bounds = array<i64: 3, 2>}, {transform_indices = @transform_4, window_bounds = array<i64: 2>}, {transform_indices = @transform_5, window_bounds = array<i64: 2, 8, 128>}]} {
    %c0 = arith.constant 0 : index
    %c0_0 = arith.constant 0 : index
    %0 = memref.load %arg2[%c0, %c0_0] : memref<4x3xf32, #tpu.memory_space<smem>>
    %c0_1 = arith.constant 0 : index
    %c1 = arith.constant 1 : index
    %1 = memref.load %arg2[%c0_1, %c1] : memref<4x3xf32, #tpu.memory_space<smem>>
    %c0_2 = arith.constant 0 : index
    %c2 = arith.constant 2 : index
    %2 = memref.load %arg2[%c0_2, %c2] : memref<4x3xf32, #tpu.memory_space<smem>>
    %c1_3 = arith.constant 1 : index
    %c0_4 = arith.constant 0 : index
    %3 = memref.load %arg2[%c1_3, %c0_4] : memref<4x3xf32, #tpu.memory_space<smem>>
    %c1_5 = arith.constant 1 : index
    %c1_6 = arith.constant 1 : index
    %4 = memref.load %arg2[%c1_5, %c1_6] : memref<4x3xf32, #tpu.memory_space<smem>>
    %c1_7 = arith.constant 1 : index
    %c2_8 = arith.constant 2 : index
    %5 = memref.load %arg2[%c1_7, %c2_8] : memref<4x3xf32, #tpu.memory_space<smem>>
    %c2_9 = arith.constant 2 : index
    %c0_10 = arith.constant 0 : index
    %6 = memref.load %arg2[%c2_9, %c0_10] : memref<4x3xf32, #tpu.memory_space<smem>>
    %c2_11 = arith.constant 2 : index
    %c1_12 = arith.constant 1 : index
    %7 = memref.load %arg2[%c2_11, %c1_12] : memref<4x3xf32, #tpu.memory_space<smem>>
    %c2_13 = arith.constant 2 : index
    %c2_14 = arith.constant 2 : index
    %8 = memref.load %arg2[%c2_13, %c2_14] : memref<4x3xf32, #tpu.memory_space<smem>>
    %c3 = arith.constant 3 : index
    %c0_15 = arith.constant 0 : index
    %9 = memref.load %arg2[%c3, %c0_15] : memref<4x3xf32, #tpu.memory_space<smem>>
    %c3_16 = arith.constant 3 : index
    %c1_17 = arith.constant 1 : index
    %10 = memref.load %arg2[%c3_16, %c1_17] : memref<4x3xf32, #tpu.memory_space<smem>>
    %c3_18 = arith.constant 3 : index
    %c2_19 = arith.constant 2 : index
    %11 = memref.load %arg2[%c3_18, %c2_19] : memref<4x3xf32, #tpu.memory_space<smem>>
    %c0_20 = arith.constant 0 : index
    %12 = memref.load %arg3[%c0_20] : memref<3xf32, #tpu.memory_space<smem>>
    %c1_21 = arith.constant 1 : index
    %13 = memref.load %arg3[%c1_21] : memref<3xf32, #tpu.memory_space<smem>>
    %c2_22 = arith.constant 2 : index
    %14 = memref.load %arg3[%c2_22] : memref<3xf32, #tpu.memory_space<smem>>
    %c0_23 = arith.constant 0 : index
    %c0_24 = arith.constant 0 : index
    %15 = memref.load %arg4[%c0_23, %c0_24] : memref<3x2xf32, #tpu.memory_space<smem>>
    %c0_25 = arith.constant 0 : index
    %c1_26 = arith.constant 1 : index
    %16 = memref.load %arg4[%c0_25, %c1_26] : memref<3x2xf32, #tpu.memory_space<smem>>
    %c1_27 = arith.constant 1 : index
    %c0_28 = arith.constant 0 : index
    %17 = memref.load %arg4[%c1_27, %c0_28] : memref<3x2xf32, #tpu.memory_space<smem>>
    %c1_29 = arith.constant 1 : index
    %c1_30 = arith.constant 1 : index
    %18 = memref.load %arg4[%c1_29, %c1_30] : memref<3x2xf32, #tpu.memory_space<smem>>
    %c2_31 = arith.constant 2 : index
    %c0_32 = arith.constant 0 : index
    %19 = memref.load %arg4[%c2_31, %c0_32] : memref<3x2xf32, #tpu.memory_space<smem>>
    %c2_33 = arith.constant 2 : index
    %c1_34 = arith.constant 1 : index
    %20 = memref.load %arg4[%c2_33, %c1_34] : memref<3x2xf32, #tpu.memory_space<smem>>
    %c0_35 = arith.constant 0 : index
    %21 = memref.load %arg5[%c0_35] : memref<2xf32, #tpu.memory_space<smem>>
    %c1_36 = arith.constant 1 : index
    %22 = memref.load %arg5[%c1_36] : memref<2xf32, #tpu.memory_space<smem>>
    %c0_37 = arith.constant 0 : index
    %c0_38 = arith.constant 0 : index
    %c0_39 = arith.constant 0 : index
    %23 = vector.load %arg1[%c0_37, %c0_38, %c0_39] : memref<4x8x128xf32, #tpu.memory_space<vmem>>, vector<4x8x128xf32>
    %24 = vector.extract_strided_slice %23 {offsets = [0, 0, 0], sizes = [1, 8, 128], strides = [1, 1, 1]} : vector<4x8x128xf32> to vector<1x8x128xf32>
    %25 = vector.shape_cast %24 : vector<1x8x128xf32> to vector<8x128xf32>
    %26 = vector.broadcast %0 : f32 to vector<8x128xf32>
    %27 = arith.mulf %26, %25 : vector<8x128xf32>
    %28 = vector.broadcast %12 : f32 to vector<8x128xf32>
    %29 = arith.addf %28, %27 : vector<8x128xf32>
    %30 = vector.extract_strided_slice %23 {offsets = [1, 0, 0], sizes = [1, 8, 128], strides = [1, 1, 1]} : vector<4x8x128xf32> to vector<1x8x128xf32>
    %31 = vector.shape_cast %30 : vector<1x8x128xf32> to vector<8x128xf32>
    %32 = vector.broadcast %3 : f32 to vector<8x128xf32>
    %33 = arith.mulf %32, %31 : vector<8x128xf32>
    %34 = arith.addf %29, %33 : vector<8x128xf32>
    %35 = vector.extract_strided_slice %23 {offsets = [2, 0, 0], sizes = [1, 8, 128], strides = [1, 1, 1]} : vector<4x8x128xf32> to vector<1x8x128xf32>
    %36 = vector.shape_cast %35 : vector<1x8x128xf32> to vector<8x128xf32>
    %37 = vector.broadcast %6 : f32 to vector<8x128xf32>
    %38 = arith.mulf %37, %36 : vector<8x128xf32>
    %39 = arith.addf %34, %38 : vector<8x128xf32>
    %40 = vector.extract_strided_slice %23 {offsets = [3, 0, 0], sizes = [1, 8, 128], strides = [1, 1, 1]} : vector<4x8x128xf32> to vector<1x8x128xf32>
    %41 = vector.shape_cast %40 : vector<1x8x128xf32> to vector<8x128xf32>
    %42 = vector.broadcast %9 : f32 to vector<8x128xf32>
    %43 = arith.mulf %42, %41 : vector<8x128xf32>
    %44 = arith.addf %39, %43 : vector<8x128xf32>
    %cst = arith.constant 5.000000e-01 : f32
    %45 = vector.broadcast %cst : f32 to vector<8x128xf32>
    %46 = arith.mulf %45, %44 : vector<8x128xf32>
    %47 = math.tanh %46 : vector<8x128xf32>
    %cst_40 = arith.constant 5.000000e-01 : f32
    %48 = vector.broadcast %cst_40 : f32 to vector<8x128xf32>
    %49 = arith.mulf %48, %47 : vector<8x128xf32>
    %cst_41 = arith.constant 5.000000e-01 : f32
    %50 = vector.broadcast %cst_41 : f32 to vector<8x128xf32>
    %51 = arith.addf %49, %50 : vector<8x128xf32>
    %52 = vector.extract_strided_slice %23 {offsets = [0, 0, 0], sizes = [1, 8, 128], strides = [1, 1, 1]} : vector<4x8x128xf32> to vector<1x8x128xf32>
    %53 = vector.shape_cast %52 : vector<1x8x128xf32> to vector<8x128xf32>
    %54 = vector.broadcast %1 : f32 to vector<8x128xf32>
    %55 = arith.mulf %54, %53 : vector<8x128xf32>
    %56 = vector.broadcast %13 : f32 to vector<8x128xf32>
    %57 = arith.addf %56, %55 : vector<8x128xf32>
    %58 = vector.extract_strided_slice %23 {offsets = [1, 0, 0], sizes = [1, 8, 128], strides = [1, 1, 1]} : vector<4x8x128xf32> to vector<1x8x128xf32>
    %59 = vector.shape_cast %58 : vector<1x8x128xf32> to vector<8x128xf32>
    %60 = vector.broadcast %4 : f32 to vector<8x128xf32>
    %61 = arith.mulf %60, %59 : vector<8x128xf32>
    %62 = arith.addf %57, %61 : vector<8x128xf32>
    %63 = vector.extract_strided_slice %23 {offsets = [2, 0, 0], sizes = [1, 8, 128], strides = [1, 1, 1]} : vector<4x8x128xf32> to vector<1x8x128xf32>
    %64 = vector.shape_cast %63 : vector<1x8x128xf32> to vector<8x128xf32>
    %65 = vector.broadcast %7 : f32 to vector<8x128xf32>
    %66 = arith.mulf %65, %64 : vector<8x128xf32>
    %67 = arith.addf %62, %66 : vector<8x128xf32>
    %68 = vector.extract_strided_slice %23 {offsets = [3, 0, 0], sizes = [1, 8, 128], strides = [1, 1, 1]} : vector<4x8x128xf32> to vector<1x8x128xf32>
    %69 = vector.shape_cast %68 : vector<1x8x128xf32> to vector<8x128xf32>
    %70 = vector.broadcast %10 : f32 to vector<8x128xf32>
    %71 = arith.mulf %70, %69 : vector<8x128xf32>
    %72 = arith.addf %67, %71 : vector<8x128xf32>
    %cst_42 = arith.constant 5.000000e-01 : f32
    %73 = vector.broadcast %cst_42 : f32 to vector<8x128xf32>
    %74 = arith.mulf %73, %72 : vector<8x128xf32>
    %75 = math.tanh %74 : vector<8x128xf32>
    %cst_43 = arith.constant 5.000000e-01 : f32
    %76 = vector.broadcast %cst_43 : f32 to vector<8x128xf32>
    %77 = arith.mulf %76, %75 : vector<8x128xf32>
    %cst_44 = arith.constant 5.000000e-01 : f32
    %78 = vector.broadcast %cst_44 : f32 to vector<8x128xf32>
    %79 = arith.addf %77, %78 : vector<8x128xf32>
    %80 = vector.extract_strided_slice %23 {offsets = [0, 0, 0], sizes = [1, 8, 128], strides = [1, 1, 1]} : vector<4x8x128xf32> to vector<1x8x128xf32>
    %81 = vector.shape_cast %80 : vector<1x8x128xf32> to vector<8x128xf32>
    %82 = vector.broadcast %2 : f32 to vector<8x128xf32>
    %83 = arith.mulf %82, %81 : vector<8x128xf32>
    %84 = vector.broadcast %14 : f32 to vector<8x128xf32>
    %85 = arith.addf %84, %83 : vector<8x128xf32>
    %86 = vector.extract_strided_slice %23 {offsets = [1, 0, 0], sizes = [1, 8, 128], strides = [1, 1, 1]} : vector<4x8x128xf32> to vector<1x8x128xf32>
    %87 = vector.shape_cast %86 : vector<1x8x128xf32> to vector<8x128xf32>
    %88 = vector.broadcast %5 : f32 to vector<8x128xf32>
    %89 = arith.mulf %88, %87 : vector<8x128xf32>
    %90 = arith.addf %85, %89 : vector<8x128xf32>
    %91 = vector.extract_strided_slice %23 {offsets = [2, 0, 0], sizes = [1, 8, 128], strides = [1, 1, 1]} : vector<4x8x128xf32> to vector<1x8x128xf32>
    %92 = vector.shape_cast %91 : vector<1x8x128xf32> to vector<8x128xf32>
    %93 = vector.broadcast %8 : f32 to vector<8x128xf32>
    %94 = arith.mulf %93, %92 : vector<8x128xf32>
    %95 = arith.addf %90, %94 : vector<8x128xf32>
    %96 = vector.extract_strided_slice %23 {offsets = [3, 0, 0], sizes = [1, 8, 128], strides = [1, 1, 1]} : vector<4x8x128xf32> to vector<1x8x128xf32>
    %97 = vector.shape_cast %96 : vector<1x8x128xf32> to vector<8x128xf32>
    %98 = vector.broadcast %11 : f32 to vector<8x128xf32>
    %99 = arith.mulf %98, %97 : vector<8x128xf32>
    %100 = arith.addf %95, %99 : vector<8x128xf32>
    %cst_45 = arith.constant 5.000000e-01 : f32
    %101 = vector.broadcast %cst_45 : f32 to vector<8x128xf32>
    %102 = arith.mulf %101, %100 : vector<8x128xf32>
    %103 = math.tanh %102 : vector<8x128xf32>
    %cst_46 = arith.constant 5.000000e-01 : f32
    %104 = vector.broadcast %cst_46 : f32 to vector<8x128xf32>
    %105 = arith.mulf %104, %103 : vector<8x128xf32>
    %cst_47 = arith.constant 5.000000e-01 : f32
    %106 = vector.broadcast %cst_47 : f32 to vector<8x128xf32>
    %107 = arith.addf %105, %106 : vector<8x128xf32>
    %108 = vector.broadcast %15 : f32 to vector<8x128xf32>
    %109 = arith.mulf %108, %51 : vector<8x128xf32>
    %110 = vector.broadcast %21 : f32 to vector<8x128xf32>
    %111 = arith.addf %110, %109 : vector<8x128xf32>
    %112 = vector.broadcast %17 : f32 to vector<8x128xf32>
    %113 = arith.mulf %112, %79 : vector<8x128xf32>
    %114 = arith.addf %111, %113 : vector<8x128xf32>
    %115 = vector.broadcast %19 : f32 to vector<8x128xf32>
    %116 = arith.mulf %115, %107 : vector<8x128xf32>
    %117 = arith.addf %114, %116 : vector<8x128xf32>
    %cst_48 = arith.constant 5.000000e-01 : f32
    %118 = vector.broadcast %cst_48 : f32 to vector<8x128xf32>
    %119 = arith.mulf %118, %117 : vector<8x128xf32>
    %120 = math.tanh %119 : vector<8x128xf32>
    %cst_49 = arith.constant 5.000000e-01 : f32
    %121 = vector.broadcast %cst_49 : f32 to vector<8x128xf32>
    %122 = arith.mulf %121, %120 : vector<8x128xf32>
    %cst_50 = arith.constant 5.000000e-01 : f32
    %123 = vector.broadcast %cst_50 : f32 to vector<8x128xf32>
    %124 = arith.addf %122, %123 : vector<8x128xf32>
    %125 = vector.broadcast %16 : f32 to vector<8x128xf32>
    %126 = arith.mulf %125, %51 : vector<8x128xf32>
    %127 = vector.broadcast %22 : f32 to vector<8x128xf32>
    %128 = arith.addf %127, %126 : vector<8x128xf32>
    %129 = vector.broadcast %18 : f32 to vector<8x128xf32>
    %130 = arith.mulf %129, %79 : vector<8x128xf32>
    %131 = arith.addf %128, %130 : vector<8x128xf32>
    %132 = vector.broadcast %20 : f32 to vector<8x128xf32>
    %133 = arith.mulf %132, %107 : vector<8x128xf32>
    %134 = arith.addf %131, %133 : vector<8x128xf32>
    %cst_51 = arith.constant 5.000000e-01 : f32
    %135 = vector.broadcast %cst_51 : f32 to vector<8x128xf32>
    %136 = arith.mulf %135, %134 : vector<8x128xf32>
    %137 = math.tanh %136 : vector<8x128xf32>
    %cst_52 = arith.constant 5.000000e-01 : f32
    %138 = vector.broadcast %cst_52 : f32 to vector<8x128xf32>
    %139 = arith.mulf %138, %137 : vector<8x128xf32>
    %cst_53 = arith.constant 5.000000e-01 : f32
    %140 = vector.broadcast %cst_53 : f32 to vector<8x128xf32>
    %141 = arith.addf %139, %140 : vector<8x128xf32>
    %142 = vector.shape_cast %124 : vector<8x128xf32> to vector<1x8x128xf32>
    %143 = vector.shape_cast %141 : vector<8x128xf32> to vector<1x8x128xf32>
    %144 = tpu.concatenate %142, %143 in 0 : vector<1x8x128xf32>, vector<1x8x128xf32> -> vector<2x8x128xf32>
    %c0_54 = arith.constant 0 : index
    %c0_55 = arith.constant 0 : index
    %c0_56 = arith.constant 0 : index
    %145 = vector.load %arg6[%c0_54, %c0_55, %c0_56] : memref<2x8x128xf32, #tpu.memory_space<vmem>>, vector<2x8x128xf32>
    tpu.vector_store %arg6[%c0_54, %c0_55, %c0_56], %144 {strides = array<i32>} : memref<2x8x128xf32, #tpu.memory_space<vmem>>, vector<2x8x128xf32>,
    return
  }
  func.func @transform_0(%arg0: i32) -> (i32, i32, i32) {
    %c0_i32 = arith.constant 0 : i32
    %c0_i32_0 = arith.constant 0 : i32
    %c0_i32_1 = arith.constant 0 : i32
    return %c0_i32, %arg0, %c0_i32_0 : i32, i32, i32
  }
  func.func @transform_1(%arg0: i32) -> (i32, i32) {
    %c0_i32 = arith.constant 0 : i32
    %c0_i32_0 = arith.constant 0 : i32
    %c0_i32_1 = arith.constant 0 : i32
    return %c0_i32, %c0_i32_0 : i32, i32
  }
  func.func @transform_2(%arg0: i32) -> i32 {
    %c0_i32 = arith.constant 0 : i32
    %c0_i32_0 = arith.constant 0 : i32
    return %c0_i32 : i32
  }
  func.func @transform_3(%arg0: i32) -> (i32, i32) {
    %c0_i32 = arith.constant 0 : i32
    %c0_i32_0 = arith.constant 0 : i32
    %c0_i32_1 = arith.constant 0 : i32
    return %c0_i32, %c0_i32_0 : i32, i32
  }
  func.func @transform_4(%arg0: i32) -> i32 {
    %c0_i32 = arith.constant 0 : i32
    %c0_i32_0 = arith.constant 0 : i32
    return %c0_i32 : i32
  }
  func.func @transform_5(%arg0: i32) -> (i32, i32, i32) {
    %c0_i32 = arith.constant 0 : i32
    %c0_i32_0 = arith.constant 0 : i32
    %c0_i32_1 = arith.constant 0 : i32
    return %c0_i32, %arg0, %c0_i32_0 : i32, i32, i32
  }
}

</mosaic_0001>

<llo_original>
// kernel: neural_net_forward.1
$region0: #{neural_net_forward.1}
  #allocation0 [shape = 'u32[]', space=smem, size = 0x4, offset = 0x4, fixed_abs, tag = 'smem constant byte address 0x4 - core index']
  #allocation1 [shape = 'u32[144,128]{1,0:T(1,128)}', space=vmem, size = 0x12000, scoped, tag = 'internal scratch']
  %s0 = inlined_call_operand.vmem [shape: f32[4,16,128], index: 0, kind: input, shape index: {}]
  %s1 = inlined_call_operand.vmem [shape: f32[4,3], index: 1, kind: input, shape index: {}]
  %s2 = inlined_call_operand.vmem [shape: f32[3], index: 2, kind: input, shape index: {}]
  %s3 = inlined_call_operand.vmem [shape: f32[3,2], index: 3, kind: input, shape index: {}]
  %s4 = inlined_call_operand.vmem [shape: f32[2], index: 4, kind: input, shape index: {}]
  %s5 = inlined_call_operand.vmem [shape: f32[2,16,128], index: 5, kind: output, shape index: {}]
  %s6 = sld [smem:[#allocation0]]
  $region141: #{neural_net_forward.1} parent=0
    _
  %s8 = ssub.s32 1, %s6
  %s9 = scalar_select 0, %s8, %s6
  $region1: #{neural_net_forward.1} parent=0
    #allocation2 [shape = 'u8[32768]{0}', space=vmem, size = 0x8000, scoped, tag = 'input window, operand 0']
    #allocation3 [shape = 'u8[2048]{0}', space=smem, size = 0x800, scoped, tag = 'input window, operand 1, single buffered']
    #allocation4 [shape = 's32[2]{0}', space=sflag, size = 0x8, scoped, tag = 'scoped memory for neural_net_forward.1']
    #allocation5 [shape = 'u8[512]{0}', space=smem, size = 0x200, scoped, tag = 'input window, operand 2, single buffered']
    #allocation6 [shape = 's32[1]{0}', space=sflag, size = 0x4, scoped, tag = 'scoped memory for neural_net_forward.1']
    #allocation7 [shape = 'u8[2048]{0}', space=smem, size = 0x800, scoped, tag = 'input window, operand 3, single buffered']
    #allocation8 [shape = 'u8[512]{0}', space=smem, size = 0x200, scoped, tag = 'input window, operand 4, single buffered']
    #allocation9 [shape = 's32[1]{0}', space=sflag, size = 0x4, scoped, tag = 'scoped memory for neural_net_forward.1']
    #allocation10 [shape = 'u8[16384]{0}', space=vmem, size = 0x4000, scoped, tag = 'output window, operand 0']
    %10 = vsyncpa [#allocation4], 0
    %11 = vsyncpa [#allocation6], 0
    %12 = vsyncpa [#allocation9], 0
    loop: start=0, step=1, limit=4
    $region2: #{neural_net_forward.1} parent=1 // loop_pre_header
      _
    $region3: #{neural_net_forward.1} parent=1 // loop_header
      %s14 = sphi 0, %s18
      %p15 = scmp.ge.s32.totalorder %s14, 4
      %s24 = sphi 0, %s26
      %s27 = sphi 0, %s24
      %s28 = sphi 0, %s27
      %s44 = sphi 0, %s28
      %s48 = sphi 0, %s48
      %s50 = sphi 0, %s48
      %s51 = sphi 0, %s50
      %s65 = sphi 0, %s51
      %s69 = sphi 0, %s69
      %s71 = sphi 0, %s69
      %s72 = sphi 0, %s71
      %s86 = sphi 0, %s72
      %s90 = sphi 0, %s90
      %s92 = sphi 0, %s90
      %s93 = sphi 0, %s92
      %s107 = sphi 0, %s93
      %s111 = sphi 0, %s111
      %s113 = sphi 0, %s111
      %s114 = sphi 0, %s113
      %s128 = sphi 0, %s114
      %s134 = sphi 0, %s136
      %s137 = sphi 0, %s134
      %s138 = sphi 0, %s137
      %s154 = sphi 0, %s138
    $region4: #{neural_net_forward.1} parent=1 // loop_header_branch
      %17 = sbr.rel (%p15) target = $region8
    $region5: #{neural_net_forward.1} parent=1 // loop_body
      %s19 = ssub.s32 %s14, 1
      %s20 = ssub.s32 %s14, 2
      %s21 = sadd.s32 %s14, 1
      %s22 = ssub.s32 %s14, %s21
      %p23 = scmp.eq.s32.totalorder %s22, 0
      %s25 = sadd.s32 %s24, 1
      %s26 = scalar_select %p23, %s24, %s25
      %p29 = pneg %p23
      %p30 = scmp.eq.s32.totalorder %s14, 1
      %p31 = por %p29, %p30
      %p32 = scmp.ne.s32.totalorder %s24, %s27
      %p33 = scmp.eq.s32.totalorder %s14, 0
      %p34 = por %p32, %p33
      %p35 = scmp.ne.s32.totalorder %s24, %s27
      %p36 = scmp.eq.s32.totalorder %s19, 1
      %p37 = por %p35, %p36
      %p38 = scmp.ne.s32.totalorder %s27, %s28
      %p39 = scmp.eq.s32.totalorder %s19, 0
      %p40 = por %p38, %p39
      %p41 = scmp.ne.s32.totalorder %s27, %s28
      %p42 = scmp.eq.s32.totalorder %s20, 1
      %p43 = por %p41, %p42
      %p45 = scmp.ne.s32.totalorder %s28, %s44
      %p46 = scmp.eq.s32.totalorder %s20, 0
      %p47 = por %p45, %p46
      %s49 = sadd.s32 %s48, 1
      %p52 = scmp.eq.s32.totalorder %s14, 1
      %p53 = scmp.ne.s32.totalorder %s48, %s50
      %p54 = scmp.eq.s32.totalorder %s14, 0
      %p55 = por %p53, %p54
      %p56 = scmp.ne.s32.totalorder %s48, %s50
      %p57 = scmp.eq.s32.totalorder %s19, 1
      %p58 = por %p56, %p57
      %p59 = scmp.ne.s32.totalorder %s50, %s51
      %p60 = scmp.eq.s32.totalorder %s19, 0
      %p61 = por %p59, %p60
      %p62 = scmp.ne.s32.totalorder %s50, %s51
      %p63 = scmp.eq.s32.totalorder %s20, 1
      %p64 = por %p62, %p63
      %p66 = scmp.ne.s32.totalorder %s51, %s65
      %p67 = scmp.eq.s32.totalorder %s20, 0
      %p68 = por %p66, %p67
      %s70 = sadd.s32 %s69, 1
      %p73 = scmp.eq.s32.totalorder %s14, 1
      %p74 = scmp.ne.s32.totalorder %s69, %s71
      %p75 = scmp.eq.s32.totalorder %s14, 0
      %p76 = por %p74, %p75
      %p77 = scmp.ne.s32.totalorder %s69, %s71
      %p78 = scmp.eq.s32.totalorder %s19, 1
      %p79 = por %p77, %p78
      %p80 = scmp.ne.s32.totalorder %s71, %s72
      %p81 = scmp.eq.s32.totalorder %s19, 0
      %p82 = por %p80, %p81
      %p83 = scmp.ne.s32.totalorder %s71, %s72
      %p84 = scmp.eq.s32.totalorder %s20, 1
      %p85 = por %p83, %p84
      %p87 = scmp.ne.s32.totalorder %s72, %s86
      %p88 = scmp.eq.s32.totalorder %s20, 0
      %p89 = por %p87, %p88
      %s91 = sadd.s32 %s90, 1
      %p94 = scmp.eq.s32.totalorder %s14, 1
      %p95 = scmp.ne.s32.totalorder %s90, %s92
      %p96 = scmp.eq.s32.totalorder %s14, 0
      %p97 = por %p95, %p96
      %p98 = scmp.ne.s32.totalorder %s90, %s92
      %p99 = scmp.eq.s32.totalorder %s19, 1
      %p100 = por %p98, %p99
      %p101 = scmp.ne.s32.totalorder %s92, %s93
      %p102 = scmp.eq.s32.totalorder %s19, 0
      %p103 = por %p101, %p102
      %p104 = scmp.ne.s32.totalorder %s92, %s93
      %p105 = scmp.eq.s32.totalorder %s20, 1
      %p106 = por %p104, %p105
      %p108 = scmp.ne.s32.totalorder %s93, %s107
      %p109 = scmp.eq.s32.totalorder %s20, 0
      %p110 = por %p108, %p109
      %s112 = sadd.s32 %s111, 1
      %p115 = scmp.eq.s32.totalorder %s14, 1
      %p116 = scmp.ne.s32.totalorder %s111, %s113
      %p117 = scmp.eq.s32.totalorder %s14, 0
      %p118 = por %p116, %p117
      %p119 = scmp.ne.s32.totalorder %s111, %s113
      %p120 = scmp.eq.s32.totalorder %s19, 1
      %p121 = por %p119, %p120
      %p122 = scmp.ne.s32.totalorder %s113, %s114
      %p123 = scmp.eq.s32.totalorder %s19, 0
      %p124 = por %p122, %p123
      %p125 = scmp.ne.s32.totalorder %s113, %s114
      %p126 = scmp.eq.s32.totalorder %s20, 1
      %p127 = por %p125, %p126
      %p129 = scmp.ne.s32.totalorder %s114, %s128
      %p130 = scmp.eq.s32.totalorder %s20, 0
      %p131 = por %p129, %p130
      %s132 = ssub.s32 %s14, %s21
      %p133 = scmp.eq.s32.totalorder %s132, 0
      %s135 = sadd.s32 %s134, 1
      %s136 = scalar_select %p133, %s134, %s135
      %p139 = pneg %p133
      %p140 = scmp.eq.s32.totalorder %s14, 1
      %p141 = por %p139, %p140
      %p142 = scmp.ne.s32.totalorder %s134, %s137
      %p143 = scmp.eq.s32.totalorder %s14, 0
      %p144 = por %p142, %p143
      %p145 = scmp.ne.s32.totalorder %s134, %s137
      %p146 = scmp.eq.s32.totalorder %s19, 1
      %p147 = por %p145, %p146
      %p148 = scmp.ne.s32.totalorder %s137, %s138
      %p149 = scmp.eq.s32.totalorder %s19, 0
      %p150 = por %p148, %p149
      %p151 = scmp.ne.s32.totalorder %s137, %s138
      %p152 = scmp.eq.s32.totalorder %s20, 1
      %p153 = por %p151, %p152
      %p155 = scmp.ne.s32.totalorder %s138, %s154
      %p156 = scmp.eq.s32.totalorder %s20, 0
      %p157 = por %p155, %p156
      %p158 = scmp.le.s32.totalorder 1, %s14
      %p159 = scmp.lt.s32.totalorder %s14, 3
      %p160 = pnand %p158, %p159
      %p161 = pneg %p160
      // Predicated region
      $region9: #{neural_net_forward.1} parent=5 // pred_check
        _
      $region10: #{neural_net_forward.1} parent=5 // pred_check_branch
        %163 = sbr.rel (%p160) target = $region12
      $region11: #{neural_net_forward.1} parent=5 // pred_region
        %s164 = ssub.s32 %s14, 1
        // Predicated region
        $region13: #{neural_net_forward.1} parent=11 // pred_check
          %p165 = pneg %p61
        $region14: #{neural_net_forward.1} parent=11 // pred_check_branch
          %167 = sbr.rel (%p165) target = $region16
        $region15: #{neural_net_forward.1} parent=11 // pred_region
          %s169 = ssub.s32 64, 64
          %170 = vsyncadd [#allocation4], %s169
          %s172 = sshll.u32 %s1, 4
          %s173 = int_to_ptr.vmem [resolvable:$true] %s172
          %175 = dma.vmem_to_smem %s173, 64, [#allocation3], [#allocation4]
        $region16: #{neural_net_forward.1} parent=11 // pred_fallthru
          _
        // Predicated region
        $region17: #{neural_net_forward.1} parent=11 // pred_check
          %p176 = pneg %p82
        $region18: #{neural_net_forward.1} parent=11 // pred_check_branch
          %178 = sbr.rel (%p176) target = $region20
        $region19: #{neural_net_forward.1} parent=11 // pred_region
          %s180 = ssub.s32 16, 16
          %181 = vsyncadd [#allocation6], %s180
          %s183 = sshll.u32 %s2, 4
          %s184 = int_to_ptr.vmem [resolvable:$true] %s183
          %186 = dma.vmem_to_smem %s184, 16, [#allocation5], [#allocation6]
        $region20: #{neural_net_forward.1} parent=11 // pred_fallthru
          _
        // Predicated region
        $region21: #{neural_net_forward.1} parent=11 // pred_check
          %p187 = pneg %p103
        $region22: #{neural_net_forward.1} parent=11 // pred_check_branch
          %189 = sbr.rel (%p187) target = $region24
        $region23: #{neural_net_forward.1} parent=11 // pred_region
          %s191 = ssub.s32 64, 64
          %192 = vsyncadd [#allocation6], %s191
          %s194 = sshll.u32 %s3, 4
          %s195 = int_to_ptr.vmem [resolvable:$true] %s194
          %197 = dma.vmem_to_smem %s195, 64, [#allocation7], [#allocation6]
        $region24: #{neural_net_forward.1} parent=11 // pred_fallthru
          _
        // Predicated region
        $region25: #{neural_net_forward.1} parent=11 // pred_check
          %p198 = pneg %p124
        $region26: #{neural_net_forward.1} parent=11 // pred_check_branch
          %200 = sbr.rel (%p198) target = $region28
        $region27: #{neural_net_forward.1} parent=11 // pred_region
          %s202 = ssub.s32 16, 16
          %203 = vsyncadd [#allocation9], %s202
          %s205 = sshll.u32 %s4, 4
          %s206 = int_to_ptr.vmem [resolvable:$true] %s205
          %208 = dma.vmem_to_smem %s206, 16, [#allocation8], [#allocation9]
        $region28: #{neural_net_forward.1} parent=11 // pred_fallthru
          _
      $region12: #{neural_net_forward.1} parent=5 // pred_fallthru
        _
      %p209 = scmp.lt.s32.totalorder %s14, 2
      // Predicated region
      $region29: #{neural_net_forward.1} parent=5 // pred_check
        %p210 = pneg %p209
      $region30: #{neural_net_forward.1} parent=5 // pred_check_branch
        %212 = sbr.rel (%p210) target = $region32
      $region31: #{neural_net_forward.1} parent=5 // pred_region
        // Predicated region
        $region33: #{neural_net_forward.1} parent=31 // pred_check
          %p213 = pneg %p34
        $region34: #{neural_net_forward.1} parent=31 // pred_check_branch
          %215 = sbr.rel (%p213) target = $region36
        $region35: #{neural_net_forward.1} parent=31 // pred_region
          %s216 = sand.u32 %s24, 1
          %s217 = sand.u32 %s24, 1
          %s218 = smul.addr %s217, 32
          %s219 = scalar_lea.vmem [#allocation2], %s218
          %s220 = smul.addr %s14, 8
          %s221 = scalar_lea.vmem %s0, %s220
          // Predicated region
          $region37: #{neural_net_forward.1} parent=35 // pred_check
            _
          $region38: #{neural_net_forward.1} parent=35 // pred_check_branch
            %223 = sbr.rel (0) target = $region40
          $region39: #{neural_net_forward.1} parent=35 // pred_region
            // Predicated region
            $region41: #{neural_net_forward.1} parent=39 // pred_check
              _
            $region42: #{neural_net_forward.1} parent=39 // pred_check_branch
              %225 = sbr.rel (0) target = $region44
            $region43: #{neural_net_forward.1} parent=39 // pred_region
              // Predicated region
              $region56: #{neural_net_forward.1} parent=43 // pred_check
                _
              $region57: #{neural_net_forward.1} parent=43 // pred_check_branch
                %247 = sbr.rel (0) target = $region59
              $region58: #{neural_net_forward.1} parent=43 // pred_region
                loop: start=0, step=1, limit=1
                $region60: #{neural_net_forward.1} parent=58 // loop_pre_header
                  _
                $region61: #{neural_net_forward.1} parent=58 // loop_header
                  %s249 = sphi 0, %s253
                  %p250 = scmp.ge.s32.totalorder %s249, 1
                  %s254 = sphi %s221, %s221
                  %s255 = sphi %s219, %s219
                $region62: #{neural_net_forward.1} parent=58 // loop_header_branch
                  %252 = sbr.rel (%p250) target = $region66
                $region63: #{neural_net_forward.1} parent=58 // loop_body
                  %v256 = vld [vmem:[%s254] sm:$0xff]
                  %257 = vst [vmem:[%s255] sm:$0xff] %v256
                  %v258 = vld [vmem:[%s254 + $0x10] sm:$0xff]
                  %259 = vst [vmem:[%s255 + $0x8] sm:$0xff] %v258
                  %v260 = vld [vmem:[%s254 + $0x20] sm:$0xff]
                  %261 = vst [vmem:[%s255 + $0x10] sm:$0xff] %v260
                  %v262 = vld [vmem:[%s254 + $0x30] sm:$0xff]
                  %263 = vst [vmem:[%s255 + $0x18] sm:$0xff] %v262
                $region64: #{neural_net_forward.1} parent=58 // loop_footer
                  %s253 = sadd.s32 1, %s249
                $region65: #{neural_net_forward.1} parent=58 // loop_footer_branch
                  %248 = sbr.rel target = $region61
                $region66: #{neural_net_forward.1} parent=58 // loop_exit
                  _
              $region59: #{neural_net_forward.1} parent=43 // pred_fallthru
                _
              // Predicated region
              $region67: #{neural_net_forward.1} parent=43 // pred_check
                _
              $region68: #{neural_net_forward.1} parent=43 // pred_check_branch
                %265 = sbr.rel target = $region70
              $region69: #{neural_net_forward.1} parent=43 // pred_region
                _
              $region70: #{neural_net_forward.1} parent=43 // pred_fallthru
                _
            $region44: #{neural_net_forward.1} parent=39 // pred_fallthru
              _
            // Predicated region
            $region45: #{neural_net_forward.1} parent=39 // pred_check
              _
            $region46: #{neural_net_forward.1} parent=39 // pred_check_branch
              %227 = sbr.rel target = $region48
            $region47: #{neural_net_forward.1} parent=39 // pred_region
              %s229 = ssub.s32 256, 1
              loop: start=0, step=1, limit=1
              $region49: #{neural_net_forward.1} parent=47 // loop_pre_header
                _
              $region50: #{neural_net_forward.1} parent=47 // loop_header
                %s231 = sphi 0, %s235
                %p232 = scmp.ge.s32.totalorder %s231, 1
                %s236 = sphi %s221, %s221
                %s237 = sphi %s219, %s219
              $region51: #{neural_net_forward.1} parent=47 // loop_header_branch
                %234 = sbr.rel (%p232) target = $region55
              $region52: #{neural_net_forward.1} parent=47 // loop_body
                %v238 = vld [vmem:[%s236] sm:%s229]
                %239 = vst [vmem:[%s237] sm:%s229] %v238
                %v240 = vld [vmem:[%s236 + $0x10] sm:%s229]
                %241 = vst [vmem:[%s237 + $0x8] sm:%s229] %v240
                %v242 = vld [vmem:[%s236 + $0x20] sm:%s229]
                %243 = vst [vmem:[%s237 + $0x10] sm:%s229] %v242
                %v244 = vld [vmem:[%s236 + $0x30] sm:%s229]
                %245 = vst [vmem:[%s237 + $0x18] sm:%s229] %v244
              $region53: #{neural_net_forward.1} parent=47 // loop_footer
                %s235 = sadd.s32 1, %s231
              $region54: #{neural_net_forward.1} parent=47 // loop_footer_branch
                %230 = sbr.rel target = $region50
              $region55: #{neural_net_forward.1} parent=47 // loop_exit
                _
            $region48: #{neural_net_forward.1} parent=39 // pred_fallthru
              _
          $region40: #{neural_net_forward.1} parent=35 // pred_fallthru
            _
          %266 = vnop
        $region36: #{neural_net_forward.1} parent=31 // pred_fallthru
          _
      $region32: #{neural_net_forward.1} parent=5 // pred_fallthru
        _
      %p267 = scmp.le.s32.totalorder 1, %s14
      %p268 = scmp.lt.s32.totalorder %s14, 3
      %p269 = pnand %p267, %p268
      %p270 = pneg %p269
      // Predicated region
      $region71: #{neural_net_forward.1} parent=5 // pred_check
        _
      $region72: #{neural_net_forward.1} parent=5 // pred_check_branch
        %272 = sbr.rel (%p269) target = $region74
      $region73: #{neural_net_forward.1} parent=5 // pred_region
        %s273 = ssub.s32 %s14, 1
        %s274 = sand.u32 %s27, 1
        %s275 = sand.u32 %s27, 1
        %s276 = smul.addr %s275, 32
        %s277 = scalar_lea.vmem [#allocation2], %s276
        // Predicated region
        $region75: #{neural_net_forward.1} parent=73 // pred_check
          %p278 = pneg %p40
        $region76: #{neural_net_forward.1} parent=73 // pred_check_branch
          %280 = sbr.rel (%p278) target = $region78
        $region77: #{neural_net_forward.1} parent=73 // pred_region
          _
        $region78: #{neural_net_forward.1} parent=73 // pred_fallthru
          _
        // Predicated region
        $region79: #{neural_net_forward.1} parent=73 // pred_check
          %p281 = pneg %p61
        $region80: #{neural_net_forward.1} parent=73 // pred_check_branch
          %283 = sbr.rel (%p281) target = $region82
        $region81: #{neural_net_forward.1} parent=73 // pred_region
          %284 = dma.done [#allocation4], 64
        $region82: #{neural_net_forward.1} parent=73 // pred_fallthru
          _
        // Predicated region
        $region83: #{neural_net_forward.1} parent=73 // pred_check
          %p285 = pneg %p82
        $region84: #{neural_net_forward.1} parent=73 // pred_check_branch
          %287 = sbr.rel (%p285) target = $region86
        $region85: #{neural_net_forward.1} parent=73 // pred_region
          %288 = dma.done [#allocation6], 16
        $region86: #{neural_net_forward.1} parent=73 // pred_fallthru
          _
        // Predicated region
        $region87: #{neural_net_forward.1} parent=73 // pred_check
          %p289 = pneg %p103
        $region88: #{neural_net_forward.1} parent=73 // pred_check_branch
          %291 = sbr.rel (%p289) target = $region90
        $region89: #{neural_net_forward.1} parent=73 // pred_region
          %292 = dma.done [#allocation6], 64
        $region90: #{neural_net_forward.1} parent=73 // pred_fallthru
          _
        // Predicated region
        $region91: #{neural_net_forward.1} parent=73 // pred_check
          %p293 = pneg %p124
        $region92: #{neural_net_forward.1} parent=73 // pred_check_branch
          %295 = sbr.rel (%p293) target = $region94
        $region93: #{neural_net_forward.1} parent=73 // pred_region
          %296 = dma.done [#allocation9], 16
        $region94: #{neural_net_forward.1} parent=73 // pred_fallthru
          _
        %297 = sfence
        %s298 = sand.u32 %s27, 1
        %s299 = sand.u32 %s27, 1
        %s300 = smul.addr %s299, 32
        %s301 = scalar_lea.vmem [#allocation2], %s300
        %p302 = pneg %p40
        %p303 = pneg %p37
        %p304 = pneg %p61
        %p305 = pneg %p58
        %p306 = pneg %p82
        %p307 = pneg %p79
        %p308 = pneg %p103
        %p309 = pneg %p100
        %p310 = pneg %p124
        %p311 = pneg %p121
        %p312 = pneg %p150
        %p313 = pneg %p147
        %s314 = sand.u32 %s137, 1
        %s315 = sand.u32 %s137, 1
        %s316 = smul.addr %s315, 16
        %s317 = scalar_lea.vmem [#allocation10], %s316
        %s318 = sld [smem:[#allocation3]]
        %s319 = sld [smem:[#allocation3 + $0x1]]
        %s320 = sld [smem:[#allocation3 + $0x2]]
        %s321 = sld [smem:[#allocation3 + $0x80]]
        %s322 = sld [smem:[#allocation3 + $0x81]]
        %s323 = sld [smem:[#allocation3 + $0x82]]
        %s324 = sld [smem:[#allocation3 + $0x100]]
        %s325 = sld [smem:[#allocation3 + $0x101]]
        %s326 = sld [smem:[#allocation3 + $0x102]]
        %s327 = sld [smem:[#allocation3 + $0x180]]
        %s328 = sld [smem:[#allocation3 + $0x181]]
        %s329 = sld [smem:[#allocation3 + $0x182]]
        %s330 = sld [smem:[#allocation5]]
        %s331 = sld [smem:[#allocation5 + $0x1]]
        %s332 = sld [smem:[#allocation5 + $0x2]]
        %s333 = sld [smem:[#allocation7]]
        %s334 = sld [smem:[#allocation7 + $0x1]]
        %s335 = sld [smem:[#allocation7 + $0x80]]
        %s336 = sld [smem:[#allocation7 + $0x81]]
        %s337 = sld [smem:[#allocation7 + $0x100]]
        %s338 = sld [smem:[#allocation7 + $0x101]]
        %s339 = sld [smem:[#allocation8]]
        %s340 = sld [smem:[#allocation8 + $0x1]]
        %v341 = vld [vmem:[%s277] sm:$0xff]
        %v342 = vld [vmem:[%s277 + $0x8] sm:$0xff]
        %v343 = vld [vmem:[%s277 + $0x10] sm:$0xff]
        %v344 = vld [vmem:[%s277 + $0x18] sm:$0xff]
        %v345 = vstv %s318
        %v346 = vmul.f32 %v345, %v341
        %v347 = vstv %s330
        %v348 = vadd.f32 %v347, %v346
        %v349 = vstv %s321
        %v350 = vmul.f32 %v349, %v342
        %v351 = vadd.f32 %v348, %v350
        %v352 = vstv %s324
        %v353 = vmul.f32 %v352, %v343
        %v354 = vadd.f32 %v351, %v353
        %v355 = vstv %s327
        %v356 = vmul.f32 %v355, %v344
        %v357 = vadd.f32 %v354, %v356
        %v358 = vmul.f32 %v357, 0.5
        %v359 = vtanh.pop %v358
        %v360 = vmul.f32 %v359, 0.5
        %v361 = vadd.f32 %v360, 0.5
        %v362 = vstv %s319
        %v363 = vmul.f32 %v362, %v341
        %v364 = vstv %s331
        %v365 = vadd.f32 %v364, %v363
        %v366 = vstv %s322
        %v367 = vmul.f32 %v366, %v342
        %v368 = vadd.f32 %v365, %v367
        %v369 = vstv %s325
        %v370 = vmul.f32 %v369, %v343
        %v371 = vadd.f32 %v368, %v370
        %v372 = vstv %s328
        %v373 = vmul.f32 %v372, %v344
        %v374 = vadd.f32 %v371, %v373
        %v375 = vmul.f32 %v374, 0.5
        %v376 = vtanh.pop %v375
        %v377 = vmul.f32 %v376, 0.5
        %v378 = vadd.f32 %v377, 0.5
        %v379 = vstv %s320
        %v380 = vmul.f32 %v379, %v341
        %v381 = vstv %s332
        %v382 = vadd.f32 %v381, %v380
        %v383 = vstv %s323
        %v384 = vmul.f32 %v383, %v342
        %v385 = vadd.f32 %v382, %v384
        %v386 = vstv %s326
        %v387 = vmul.f32 %v386, %v343
        %v388 = vadd.f32 %v385, %v387
        %v389 = vstv %s329
        %v390 = vmul.f32 %v389, %v344
        %v391 = vadd.f32 %v388, %v390
        %v392 = vmul.f32 %v391, 0.5
        %v393 = vtanh.pop %v392
        %v394 = vmul.f32 %v393, 0.5
        %v395 = vadd.f32 %v394, 0.5
        %v396 = vstv %s333
        %v397 = vmul.f32 %v396, %v361
        %v398 = vstv %s339
        %v399 = vadd.f32 %v398, %v397
        %v400 = vstv %s335
        %v401 = vmul.f32 %v400, %v378
        %v402 = vadd.f32 %v399, %v401
        %v403 = vstv %s337
        %v404 = vmul.f32 %v403, %v395
        %v405 = vadd.f32 %v402, %v404
        %v406 = vmul.f32 %v405, 0.5
        %v407 = vtanh.pop %v406
        %v408 = vmul.f32 %v407, 0.5
        %v409 = vadd.f32 %v408, 0.5
        %v410 = vstv %s334
        %v411 = vmul.f32 %v410, %v361
        %v412 = vstv %s340
        %v413 = vadd.f32 %v412, %v411
        %v414 = vstv %s336
        %v415 = vmul.f32 %v414, %v378
        %v416 = vadd.f32 %v413, %v415
        %v417 = vstv %s338
        %v418 = vmul.f32 %v417, %v395
        %v419 = vadd.f32 %v416, %v418
        %v420 = vmul.f32 %v419, 0.5
        %v421 = vtanh.pop %v420
        %v422 = vmul.f32 %v421, 0.5
        %v423 = vadd.f32 %v422, 0.5
        %424 = vst [vmem:[%s317] sm:$0xff] %v409
        %425 = vst [vmem:[%s317 + $0x8] sm:$0xff] %v423
        %s426 = sand.u32 %s137, 1
        %s427 = sand.u32 %s137, 1
        %s428 = smul.addr %s427, 16
        %s429 = scalar_lea.vmem [#allocation10], %s428
        // Predicated region
        $region95: #{neural_net_forward.1} parent=73 // pred_check
          %p430 = pneg %p147
        $region96: #{neural_net_forward.1} parent=73 // pred_check_branch
          %432 = sbr.rel (%p430) target = $region98
        $region97: #{neural_net_forward.1} parent=73 // pred_region
          %s433 = smul.addr %s19, 8
          %s434 = scalar_lea.vmem %s5, %s433
          // Predicated region
          $region99: #{neural_net_forward.1} parent=97 // pred_check
            _
          $region100: #{neural_net_forward.1} parent=97 // pred_check_branch
            %436 = sbr.rel (0) target = $region102
          $region101: #{neural_net_forward.1} parent=97 // pred_region
            // Predicated region
            $region103: #{neural_net_forward.1} parent=101 // pred_check
              _
            $region104: #{neural_net_forward.1} parent=101 // pred_check_branch
              %438 = sbr.rel (0) target = $region106
            $region105: #{neural_net_forward.1} parent=101 // pred_region
              // Predicated region
              $region118: #{neural_net_forward.1} parent=105 // pred_check
                _
              $region119: #{neural_net_forward.1} parent=105 // pred_check_branch
                %456 = sbr.rel (0) target = $region121
              $region120: #{neural_net_forward.1} parent=105 // pred_region
                loop: start=0, step=1, limit=1
                $region122: #{neural_net_forward.1} parent=120 // loop_pre_header
                  _
                $region123: #{neural_net_forward.1} parent=120 // loop_header
                  %s458 = sphi 0, %s462
                  %p459 = scmp.ge.s32.totalorder %s458, 1
                  %s463 = sphi %s429, %s429
                  %s464 = sphi %s434, %s434
                $region124: #{neural_net_forward.1} parent=120 // loop_header_branch
                  %461 = sbr.rel (%p459) target = $region128
                $region125: #{neural_net_forward.1} parent=120 // loop_body
                  %v465 = vld [vmem:[%s463] sm:$0xff]
                  %466 = vst [vmem:[%s464] sm:$0xff] %v465
                  %v467 = vld [vmem:[%s463 + $0x8] sm:$0xff]
                  %468 = vst [vmem:[%s464 + $0x10] sm:$0xff] %v467
                $region126: #{neural_net_forward.1} parent=120 // loop_footer
                  %s462 = sadd.s32 1, %s458
                $region127: #{neural_net_forward.1} parent=120 // loop_footer_branch
                  %457 = sbr.rel target = $region123
                $region128: #{neural_net_forward.1} parent=120 // loop_exit
                  _
              $region121: #{neural_net_forward.1} parent=105 // pred_fallthru
                _
              // Predicated region
              $region129: #{neural_net_forward.1} parent=105 // pred_check
                _
              $region130: #{neural_net_forward.1} parent=105 // pred_check_branch
                %470 = sbr.rel target = $region132
              $region131: #{neural_net_forward.1} parent=105 // pred_region
                _
              $region132: #{neural_net_forward.1} parent=105 // pred_fallthru
                _
            $region106: #{neural_net_forward.1} parent=101 // pred_fallthru
              _
            // Predicated region
            $region107: #{neural_net_forward.1} parent=101 // pred_check
              _
            $region108: #{neural_net_forward.1} parent=101 // pred_check_branch
              %440 = sbr.rel target = $region110
            $region109: #{neural_net_forward.1} parent=101 // pred_region
              %s442 = ssub.s32 256, 1
              loop: start=0, step=1, limit=1
              $region111: #{neural_net_forward.1} parent=109 // loop_pre_header
                _
              $region112: #{neural_net_forward.1} parent=109 // loop_header
                %s444 = sphi 0, %s448
                %p445 = scmp.ge.s32.totalorder %s444, 1
                %s449 = sphi %s429, %s429
                %s450 = sphi %s434, %s434
              $region113: #{neural_net_forward.1} parent=109 // loop_header_branch
                %447 = sbr.rel (%p445) target = $region117
              $region114: #{neural_net_forward.1} parent=109 // loop_body
                %v451 = vld [vmem:[%s449] sm:%s442]
                %452 = vst [vmem:[%s450] sm:%s442] %v451
                %v453 = vld [vmem:[%s449 + $0x8] sm:%s442]
                %454 = vst [vmem:[%s450 + $0x10] sm:%s442] %v453
              $region115: #{neural_net_forward.1} parent=109 // loop_footer
                %s448 = sadd.s32 1, %s444
              $region116: #{neural_net_forward.1} parent=109 // loop_footer_branch
                %443 = sbr.rel target = $region112
              $region117: #{neural_net_forward.1} parent=109 // loop_exit
                _
            $region110: #{neural_net_forward.1} parent=101 // pred_fallthru
              _
          $region102: #{neural_net_forward.1} parent=97 // pred_fallthru
            _
          %471 = vnop
        $region98: #{neural_net_forward.1} parent=73 // pred_fallthru
          _
      $region74: #{neural_net_forward.1} parent=5 // pred_fallthru
        _
      %p472 = scmp.le.s32.totalorder 2, %s14
      // Predicated region
      $region133: #{neural_net_forward.1} parent=5 // pred_check
        %p473 = pneg %p472
      $region134: #{neural_net_forward.1} parent=5 // pred_check_branch
        %475 = sbr.rel (%p473) target = $region136
      $region135: #{neural_net_forward.1} parent=5 // pred_region
        %s476 = ssub.s32 %s14, 2
        // Predicated region
        $region137: #{neural_net_forward.1} parent=135 // pred_check
          %p477 = pneg %p153
        $region138: #{neural_net_forward.1} parent=135 // pred_check_branch
          %479 = sbr.rel (%p477) target = $region140
        $region139: #{neural_net_forward.1} parent=135 // pred_region
          %s480 = sand.u32 %s138, 1
          %s481 = sand.u32 %s138, 1
          %s482 = smul.addr %s481, 16
          %s483 = scalar_lea.vmem [#allocation10], %s482
        $region140: #{neural_net_forward.1} parent=135 // pred_fallthru
          _
      $region136: #{neural_net_forward.1} parent=5 // pred_fallthru
        _
    $region6: #{neural_net_forward.1} parent=1 // loop_footer
      %s18 = sadd.s32 1, %s14
    $region7: #{neural_net_forward.1} parent=1 // loop_footer_branch
      %13 = sbr.rel target = $region3
    $region8: #{neural_net_forward.1} parent=1 // loop_exit
      _
    %484 = vsyncpa [#allocation4], 1
    %s485 = scalar_lea.sflag [#allocation4], 1
    %486 = vsyncpa %s485, 1
    %487 = vsyncpa [#allocation6], 1
    %488 = vsyncpa [#allocation9], 1

</llo_original>
